<compile_context>
chip_gen: v5e
topology: v5e:2x2
jax: 0.10.0
libtpu: 0.0.40
codegen_flags: <defaults>
</compile_context>

<pallas_src>
import jax
import jax.numpy as jnp
from jax.experimental import pallas as pl
from jax.experimental.pallas import tpu as pltpu


def _gated_tconv_kernel(x_ref, w_ref, o_ref):
    # x_ref: (bb, K_tot, N_out) bf16  — im2col'd taps (kt-major, c-minor) + ones row for bias
    # w_ref: (2*c_out, K_tot)   bf16  — conv taps with Align folded into tap Kt-1 P-half,
    #                                   fused bias as the last column
    # o_ref: (bb, c_out, N_out)       — lane-dense output store
    bb = x_ref.shape[0]
    c_out = o_ref.shape[1]
    w = w_ref[...]                                     # loaded once, reused across bb batches
    for b in range(bb):                                # bb is a small static int -> unrolled
        # Single MXU contraction, K = Kt*c_in + 1, f32 accumulation.
        acc = jnp.dot(w, x_ref[b], preferred_element_type=jnp.float32)   # (2*c_out, N_out)
        # GLU gate. P/Q split is a sublane slice at offset c_out (f32-tile aligned).
        p = acc[:c_out, :]                             # residual / align / bias already inside
        q = acc[c_out:, :]
        o_ref[b, :, :] = (p * jax.nn.sigmoid(q)).astype(o_ref.dtype)


def prepare_gated_tconv_params(w_conv, b_conv, a_align, b_align, Kt):
    """Fold the (purely linear) Align path and the bias into one im2col weight matrix.

    w_conv : (Kt, c_in, 2*c_out) f32     b_conv : (2*c_out,) f32
    a_align: (c_in, c_out)       f32     b_align: (c_out,)   f32
    Returns w_k: (2*c_out, Kt*c_in + 1) bf16 (last column = fused bias).
    """
    Kt_w, c_in, two_c_out = w_conv.shape
    assert Kt_w == Kt
    c_out = two_c_out // 2
    # Align must be a pure linear map (identity / zero-pad / 1x1 conv) for the fold — it is,
    # by construction, since it is passed in as (a_align, b_align).
    assert a_align.shape == (c_in, c_out) and b_align.shape == (c_out,)
    # Exact algebra in f32: conv_p(x) + x[:, Kt-1:] @ a_align == conv with a_align added to
    # tap Kt-1 of the P-half weights (and b_align added to the P-half bias).
    w_fused = w_conv.at[Kt - 1, :, :c_out].add(a_align)
    b_fused = b_conv.at[:c_out].add(b_align)
    # Columns ordered kt-major / c-minor to match the im2col operand, bias column appended.
    w_mat = jnp.transpose(w_fused, (2, 0, 1)).reshape(two_c_out, Kt * c_in)
    w_mat = jnp.concatenate([w_mat, b_fused.reshape(two_c_out, 1)], axis=1)
    return w_mat.astype(jnp.bfloat16)                  # (2*c_out, Kt*c_in + 1)


def _im2col_bias(x_nchw, Kt):
    """(B, c_in, T, V) f32 -> (B, Kt*c_in + 1, T_out*V) bf16, last row = ones (bias lane)."""
    B, c_in, T, V = x_nchw.shape
    T_out = T - Kt + 1
    xb = x_nchw.astype(jnp.bfloat16)                   # cast first: halve the im2col bytes
    taps = jnp.stack([xb[:, :, kt:kt + T_out, :] for kt in range(Kt)], axis=1)
    x_col = taps.reshape(B, Kt * c_in, T_out * V)      # kt-major, c-minor rows
    ones = jnp.ones((B, 1, T_out * V), jnp.bfloat16)
    return jnp.concatenate([x_col, ones], axis=1)


def gated_temporal_conv(x_nchw, w_k, Kt, *, out_dtype=jnp.float32, bb_max=8):
    """x_nchw: (B, c_in, T, V) f32. Returns (B, c_out, T_out, V) in out_dtype (NCHW)."""
    B, c_in, T, V = x_nchw.shape
    two_c_out, K_tot = w_k.shape
    assert K_tot == Kt * c_in + 1
    c_out = two_c_out // 2
    T_out = T - Kt + 1
    N_out = T_out * V

    x_col = _im2col_bias(x_nchw, Kt)                   # pre-im2col in the wrapper (one XLA pass)

    # Batch-block sizing: keep double-buffered (x + out) tiles under a budget that is safe on
    # every generation's scoped VMEM once vmem_limit_bytes is raised to 32 MiB, and prefer a
    # grid of >= 2 steps so both v7x TensorCores are fed.
    in_bytes = K_tot * N_out * 2
    out_bytes = c_out * N_out * jnp.dtype(out_dtype).itemsize
    budget = 24 * 1024 * 1024
    divs = [d for d in range(1, min(B, bb_max) + 1) if B % d == 0]
    fitting = [d for d in divs if 2 * d * (in_bytes + out_bytes) <= budget] or [1]
    pref = [d for d in fitting if B // d >= 2] or fitting
    bb = max(pref)

    out = pl.pallas_call(
        _gated_tconv_kernel,
        out_shape=jax.ShapeDtypeStruct((B, c_out, N_out), out_dtype),
        grid_spec=pltpu.PrefetchScalarGridSpec(
            num_scalar_prefetch=0,
            grid=(B // bb,),
            in_specs=[
                pl.BlockSpec((bb, K_tot, N_out), lambda g: (g, 0, 0)),
                pl.BlockSpec((two_c_out, K_tot), lambda g: (0, 0)),
            ],
            out_specs=pl.BlockSpec((bb, c_out, N_out), lambda g: (g, 0, 0)),
        ),
        compiler_params=pltpu.CompilerParams(
            dimension_semantics=("parallel",),
            vmem_limit_bytes=32 * 1024 * 1024,
        ),
    )(x_col, w_k)

    return out.reshape(B, c_out, T_out, V)             # free trailing-dims reshape to NCHW


# ----------------------------- references for self-test ------------------------------------


def _reference_pytorch(x_nchw, w_conv, b_conv, a_align, b_align, Kt):
    """Pure-JAX f32 mirror of the PyTorch forward (unfused Align path)."""
    B, c_in, T, V = x_nchw.shape
    c_out = w_conv.shape[2] // 2
    T_out = T - Kt + 1
    x = jnp.transpose(x_nchw, (0, 2, 3, 1))            # (B, T, V, c_in)
    conv = jnp.zeros((B, T_out, V, 2 * c_out), jnp.float32)
    for kt in range(Kt):
        conv = conv + jnp.einsum("btvc,cd->btvd", x[:, kt:kt + T_out], w_conv[kt])
    conv = conv + b_conv
    x_res = jnp.einsum("btvc,cd->btvd", x[:, Kt - 1:Kt - 1 + T_out], a_align) + b_align
    out = (conv[..., :c_out] + x_res) * jax.nn.sigmoid(conv[..., c_out:])
    return jnp.transpose(out, (0, 3, 1, 2))


def _reference_kernel_math(x_nchw, w_k, Kt):
    """Same math as the kernel on the exact bf16-cast / fused / im2col inputs (tight check)."""
    B, c_in, T, V = x_nchw.shape
    two_c_out = w_k.shape[0]
    c_out = two_c_out // 2
    T_out = T - Kt + 1
    x_col = _im2col_bias(x_nchw, Kt).astype(jnp.float32)
    w = w_k.astype(jnp.float32)
    acc = jnp.einsum("ok,bkn->bon", w, x_col)
    out = acc[:, :c_out] * jax.nn.sigmoid(acc[:, c_out:])
    return out.reshape(B, c_out, T_out, V)


if __name__ == "__main__":
    # Small shapes consistent with the module: B=2, c_in=4, c_out=8, Kt=3, T=12, V=16.
    B, c_in, c_out, Kt, T, V = 2, 4, 8, 3, 12, 16

    key = jax.random.PRNGKey(0)
    k_x, k_w, k_b = jax.random.split(key, 3)

    x = jax.random.normal(k_x, (B, c_in, T, V), dtype=jnp.float32)

    # CausalConv2d weights: PyTorch shape (2*c_out, c_in, Kt, 1) -> layout (Kt, c_in, 2*c_out)
    w_torch = 0.1 * jax.random.normal(k_w, (2 * c_out, c_in, Kt, 1), dtype=jnp.float32)
    w_conv = jnp.transpose(w_torch[..., 0], (2, 1, 0))                  # (Kt, c_in, 2*c_out)
    b_conv = 0.1 * jax.random.normal(k_b, (2 * c_out,), dtype=jnp.float32)

    # Align: c_in < c_out -> channel zero-pad == [I; 0] linear map with zero bias.
    a_align = jnp.eye(c_in, c_out, dtype=jnp.float32)                   # (c_in, c_out)
    b_align = jnp.zeros((c_out,), dtype=jnp.float32)

    w_k = prepare_gated_tconv_params(w_conv, b_conv, a_align, b_align, Kt)

    out = gated_temporal_conv(x, w_k, Kt)                               # f32 output
    out = jax.block_until_ready(out)
    assert out.shape == (B, c_out, T - Kt + 1, V)

    # Tight check: identical bf16/fused/im2col inputs, f32 accumulation (validates the kernel).
    ref_tight = _reference_kernel_math(x, w_k, Kt)
    assert jnp.allclose(out, ref_tight, atol=1e-4, rtol=1e-4), \
        float(jnp.max(jnp.abs(out - ref_tight)))

    # Semantics check vs. the full-f32 PyTorch forward (tolerance reflects bf16 operand rounding).
    ref_f32 = _reference_pytorch(x, w_conv, b_conv, a_align, b_align, Kt)
    assert jnp.allclose(out, ref_f32, atol=5e-2, rtol=5e-2), \
        float(jnp.max(jnp.abs(out - ref_f32)))

    # bf16-output path (halves the output HBM stream for downstream bf16 consumers).
    out_bf16 = jax.block_until_ready(gated_temporal_conv(x, w_k, Kt, out_dtype=jnp.bfloat16))
    assert out_bf16.dtype == jnp.bfloat16
    assert jnp.allclose(out_bf16.astype(jnp.float32), ref_f32, atol=5e-2, rtol=5e-2), \
        float(jnp.max(jnp.abs(out_bf16.astype(jnp.float32) - ref_f32)))

    print("KERNEL_OK")
</pallas_src>

<mosaic_0001>
module attributes {stable_mosaic.version = 11 : i64} {
  func.func @_gated_tconv_kernel(%arg0: i32, %arg1: memref<1x13x160xbf16, #tpu.memory_space<vmem>>, %arg2: memref<16x13xbf16, #tpu.memory_space<vmem>>, %arg3: memref<1x8x160xf32, #tpu.memory_space<vmem>>) attributes {dimension_semantics = [#tpu.dimension_semantics<parallel>], iteration_bounds = array<i64: 2>, scalar_prefetch = 0 : i64, scratch_operands = 0 : i64, tpu.core_type = #tpu.core_type<tc>, window_params = [{transform_indices = @transform_0, window_bounds = array<i64: 1, 13, 160>}, {pipeline_mode = #tpu.pipeline_mode<synchronous>, transform_indices = @transform_1, window_bounds = array<i64: 16, 13>}, {transform_indices = @transform_2, window_bounds = array<i64: 1, 8, 160>}]} {
    %c0 = arith.constant 0 : index
    %c0_0 = arith.constant 0 : index
    %0 = vector.load %arg2[%c0, %c0_0] : memref<16x13xbf16, #tpu.memory_space<vmem>>, vector<16x13xbf16>
    %c0_1 = arith.constant 0 : index
    %c0_2 = arith.constant 0 : index
    %c0_3 = arith.constant 0 : index
    %1 = vector.load %arg1[%c0_1, %c0_2, %c0_3] : memref<1x13x160xbf16, #tpu.memory_space<vmem>>, vector<1x13x160xbf16>
    %2 = vector.shape_cast %1 : vector<1x13x160xbf16> to vector<13x160xbf16>
    %cst = arith.constant dense<0.000000e+00> : vector<16x160xf32>
    %3 = tpu.matmul %0, %2, %cst {dimension_numbers = #tpu.dot_dimension_numbers<[1], [0], [0], [1], [0, 0, 1, 1], [], []>} : vector<16x13xbf16>, vector<13x160xbf16>, vector<16x160xf32> -> vector<16x160xf32>
    %4 = vector.extract_strided_slice %3 {offsets = [0, 0], sizes = [8, 160], strides = [1, 1]} : vector<16x160xf32> to vector<8x160xf32>
    %5 = vector.extract_strided_slice %3 {offsets = [8, 0], sizes = [8, 160], strides = [1, 1]} : vector<16x160xf32> to vector<8x160xf32>
    %6 = arith.negf %5 : vector<8x160xf32>
    %7 = math.exp %6 : vector<8x160xf32>
    %cst_4 = arith.constant 1.000000e+00 : f32
    %8 = vector.broadcast %cst_4 : f32 to vector<8x160xf32>
    %9 = arith.addf %8, %7 : vector<8x160xf32>
    %10 = arith.divf %8, %9 : vector<8x160xf32>
    %11 = arith.mulf %4, %10 : vector<8x160xf32>
    %c0_5 = arith.constant 0 : index
    %c0_6 = arith.constant 0 : index
    %c0_7 = arith.constant 0 : index
    %12 = vector.load %arg3[%c0_5, %c0_6, %c0_7] : memref<1x8x160xf32, #tpu.memory_space<vmem>>, vector<1x8x160xf32>
    %13 = vector.shape_cast %12 : vector<1x8x160xf32> to vector<8x160xf32>
    %14 = vector.shape_cast %11 : vector<8x160xf32> to vector<1x8x160xf32>
    tpu.vector_store %arg3[%c0_5, %c0_6, %c0_7], %14 {strides = array<i32>} : memref<1x8x160xf32, #tpu.memory_space<vmem>>, vector<1x8x160xf32>,
    return
  }
  func.func @transform_0(%arg0: i32) -> (i32, i32, i32) {
    %c0_i32 = arith.constant 0 : i32
    %c0_i32_0 = arith.constant 0 : i32
    %c0_i32_1 = arith.constant 0 : i32
    return %arg0, %c0_i32, %c0_i32_0 : i32, i32, i32
  }
  func.func @transform_1(%arg0: i32) -> (i32, i32) {
    %c0_i32 = arith.constant 0 : i32
    %c0_i32_0 = arith.constant 0 : i32
    %c0_i32_1 = arith.constant 0 : i32
    return %c0_i32, %c0_i32_0 : i32, i32
  }
  func.func @transform_2(%arg0: i32) -> (i32, i32, i32) {
    %c0_i32 = arith.constant 0 : i32
    %c0_i32_0 = arith.constant 0 : i32
    %c0_i32_1 = arith.constant 0 : i32
    return %arg0, %c0_i32, %c0_i32_0 : i32, i32, i32
  }
}

</mosaic_0001>

<llo_original>
// kernel: tpu_custom_call.1
$region0: #{tpu_custom_call.1}
  #allocation0 [shape = 'u32[]', space=smem, size = 0x4, offset = 0x4, fixed_abs, tag = 'smem constant byte address 0x4 - core index']
  #allocation1 [shape = 'u32[72,128]{1,0:T(1,128)}', space=vmem, size = 0x9000, scoped, tag = 'internal scratch']
  %s0 = inlined_call_operand.vmem [shape: bf16[2,13,160], index: 0, kind: input, shape index: {}]
  %s1 = inlined_call_operand.vmem [shape: bf16[16,13], index: 1, kind: input, shape index: {}]
  %s2 = inlined_call_operand.hbm [shape: f32[2,8,160], index: 2, kind: output, shape index: {}]
  %s3 = sld [smem:[#allocation0]]
  $region41: #{tpu_custom_call.1} parent=0
    _
  %s5 = ssub.s32 1, %s3
  %s6 = scalar_select 0, %s5, %s3
  $region1: #{tpu_custom_call.1} parent=0
    #allocation2 [shape = 'u8[16384]{0}', space=vmem, size = 0x4000, scoped, tag = 'output window, operand 0']
    #allocation3 [shape = 's32[2]{0}', space=sflag, size = 0x8, scoped, tag = 'scoped memory for tpu_custom_call.1']
    %7 = vsyncpa [#allocation3], 0
    %s8 = scalar_lea.sflag [#allocation3], 1
    %9 = vsyncpa %s8, 0
    loop: start=0, step=1, limit=4
    $region2: #{tpu_custom_call.1} parent=1 // loop_pre_header
      _
    $region3: #{tpu_custom_call.1} parent=1 // loop_header
      %s11 = sphi 0, %s15
      %p12 = scmp.ge.s32.totalorder %s11, 4
      %s21 = sphi 0, %s23
      %s24 = sphi 0, %s21
      %s25 = sphi 0, %s24
      %s41 = sphi 0, %s25
      %s45 = sphi 0, %s45
      %s47 = sphi 0, %s45
      %s48 = sphi 0, %s47
      %s62 = sphi 0, %s48
      %s68 = sphi 0, %s70
      %s71 = sphi 0, %s68
      %s72 = sphi 0, %s71
      %s88 = sphi 0, %s72
    $region4: #{tpu_custom_call.1} parent=1 // loop_header_branch
      %14 = sbr.rel (%p12) target = $region8
    $region5: #{tpu_custom_call.1} parent=1 // loop_body
      %s16 = ssub.s32 %s11, 1
      %s17 = ssub.s32 %s11, 2
      %s18 = sadd.s32 %s11, 1
      %s19 = ssub.s32 %s11, %s18
      %p20 = scmp.eq.s32.totalorder %s19, 0
      %s22 = sadd.s32 %s21, 1
      %s23 = scalar_select %p20, %s21, %s22
      %p26 = pneg %p20
      %p27 = scmp.eq.s32.totalorder %s11, 1
      %p28 = por %p26, %p27
      %p29 = scmp.ne.s32.totalorder %s21, %s24
      %p30 = scmp.eq.s32.totalorder %s11, 0
      %p31 = por %p29, %p30
      %p32 = scmp.ne.s32.totalorder %s21, %s24
      %p33 = scmp.eq.s32.totalorder %s16, 1
      %p34 = por %p32, %p33
      %p35 = scmp.ne.s32.totalorder %s24, %s25
      %p36 = scmp.eq.s32.totalorder %s16, 0
      %p37 = por %p35, %p36
      %p38 = scmp.ne.s32.totalorder %s24, %s25
      %p39 = scmp.eq.s32.totalorder %s17, 1
      %p40 = por %p38, %p39
      %p42 = scmp.ne.s32.totalorder %s25, %s41
      %p43 = scmp.eq.s32.totalorder %s17, 0
      %p44 = por %p42, %p43
      %s46 = sadd.s32 %s45, 1
      %p49 = scmp.eq.s32.totalorder %s11, 1
      %p50 = scmp.ne.s32.totalorder %s45, %s47
      %p51 = scmp.eq.s32.totalorder %s11, 0
      %p52 = por %p50, %p51
      %p53 = scmp.ne.s32.totalorder %s45, %s47
      %p54 = scmp.eq.s32.totalorder %s16, 1
      %p55 = por %p53, %p54
      %p56 = scmp.ne.s32.totalorder %s47, %s48
      %p57 = scmp.eq.s32.totalorder %s16, 0
      %p58 = por %p56, %p57
      %p59 = scmp.ne.s32.totalorder %s47, %s48
      %p60 = scmp.eq.s32.totalorder %s17, 1
      %p61 = por %p59, %p60
      %p63 = scmp.ne.s32.totalorder %s48, %s62
      %p64 = scmp.eq.s32.totalorder %s17, 0
      %p65 = por %p63, %p64
      %s66 = ssub.s32 %s11, %s18
      %p67 = scmp.eq.s32.totalorder %s66, 0
      %s69 = sadd.s32 %s68, 1
      %s70 = scalar_select %p67, %s68, %s69
      %p73 = pneg %p67
      %p74 = scmp.eq.s32.totalorder %s11, 1
      %p75 = por %p73, %p74
      %p76 = scmp.ne.s32.totalorder %s68, %s71
      %p77 = scmp.eq.s32.totalorder %s11, 0
      %p78 = por %p76, %p77
      %p79 = scmp.ne.s32.totalorder %s68, %s71
      %p80 = scmp.eq.s32.totalorder %s16, 1
      %p81 = por %p79, %p80
      %p82 = scmp.ne.s32.totalorder %s71, %s72
      %p83 = scmp.eq.s32.totalorder %s16, 0
      %p84 = por %p82, %p83
      %p85 = scmp.ne.s32.totalorder %s71, %s72
      %p86 = scmp.eq.s32.totalorder %s17, 1
      %p87 = por %p85, %p86
      %p89 = scmp.ne.s32.totalorder %s72, %s88
      %p90 = scmp.eq.s32.totalorder %s17, 0
      %p91 = por %p89, %p90
      %p92 = scmp.le.s32.totalorder 1, %s11
      %p93 = scmp.lt.s32.totalorder %s11, 3
      %p94 = pnand %p92, %p93
      %p95 = pneg %p94
      // Predicated region
      $region9: #{tpu_custom_call.1} parent=5 // pred_check
        _
      $region10: #{tpu_custom_call.1} parent=5 // pred_check_branch
        %97 = sbr.rel (%p94) target = $region12
      $region11: #{tpu_custom_call.1} parent=5 // pred_region
        %s98 = ssub.s32 %s11, 1
        // Predicated region
        $region13: #{tpu_custom_call.1} parent=11 // pred_check
          %p99 = pneg %p58
        $region14: #{tpu_custom_call.1} parent=11 // pred_check_branch
          %101 = sbr.rel (%p99) target = $region16
        $region15: #{tpu_custom_call.1} parent=11 // pred_region
          _
        $region16: #{tpu_custom_call.1} parent=11 // pred_fallthru
          _
      $region12: #{tpu_custom_call.1} parent=5 // pred_fallthru
        _
      %p102 = scmp.lt.s32.totalorder %s11, 2
      // Predicated region
      $region17: #{tpu_custom_call.1} parent=5 // pred_check
        %p103 = pneg %p102
      $region18: #{tpu_custom_call.1} parent=5 // pred_check_branch
        %105 = sbr.rel (%p103) target = $region20
      $region19: #{tpu_custom_call.1} parent=5 // pred_region
        // Predicated region
        $region21: #{tpu_custom_call.1} parent=19 // pred_check
          %p106 = pneg %p31
        $region22: #{tpu_custom_call.1} parent=19 // pred_check_branch
          %108 = sbr.rel (%p106) target = $region24
        $region23: #{tpu_custom_call.1} parent=19 // pred_region
          %p109 = scmp.lt.s32.totalorder %s11, 1
          %s110 = scalar_select %p109, %s11, 1
          %s111 = smul.addr %s110, 4
          %s112 = smul.addr %s111, 4
          %s113 = scalar_lea.vmem %s0, %s112
        $region24: #{tpu_custom_call.1} parent=19 // pred_fallthru
          _
      $region20: #{tpu_custom_call.1} parent=5 // pred_fallthru
        _
      %p114 = scmp.le.s32.totalorder 1, %s11
      %p115 = scmp.lt.s32.totalorder %s11, 3
      %p116 = pnand %p114, %p115
      %p117 = pneg %p116
      // Predicated region
      $region25: #{tpu_custom_call.1} parent=5 // pred_check
        _
      $region26: #{tpu_custom_call.1} parent=5 // pred_check_branch
        %119 = sbr.rel (%p116) target = $region28
      $region27: #{tpu_custom_call.1} parent=5 // pred_region
        %s120 = ssub.s32 %s11, 1
        %p121 = scmp.lt.s32.totalorder %s16, 1
        %s122 = scalar_select %p121, %s16, 1
        %s123 = smul.addr %s122, 4
        %s124 = smul.addr %s123, 4
        %s125 = scalar_lea.vmem %s0, %s124
        %p126 = pneg %p37
        %p127 = pneg %p34
        %p128 = pneg %p58
        %p129 = pneg %p55
        %p130 = pneg %p84
        %p131 = pneg %p81
        %s132 = sand.u32 %s71, 1
        %s133 = scalar_lea.sflag [#allocation3], %s132
        %s134 = sand.u32 %s71, 1
        %s135 = smul.addr %s134, 16
        %s136 = scalar_lea.vmem [#allocation2], %s135
        %p137 = scmp.lt.s32.totalorder %s16, 1
        %s138 = scalar_select %p137, %s16, 1
        %s139 = smul.addr %s138, 4
        %s140 = smul.addr %s139, 4
        %s141 = scalar_lea.vmem %s0, %s140
        %v143 = vld [vmem:[%s1] sm:$0xf]
        %v144 = vld [vmem:[%s1 + $0x4] sm:$0xf]
        %v145 = vld [vmem:[%s141] sm:$0xff]
        %v146 = vld [vmem:[%s141 + $0x8] sm:$0x77]
        %v149 = vunpack.c.l.b16 %v143
        %v150 = vunpack.c.l.b16 %v144
        %v151 = vpack.c.b16 %v150, %v149
        %v154 = vunpack.c.l.b16 %v145
        %v155 = vunpack.c.h.b16 %v145
        %v156 = vunpack.c.l.b16 %v146
        %v157 = vunpack.c.h.b16 %v146
        %v158 = vpack.c.b16 %v156, %v154
        %v159 = vpack.c.b16 %v157, %v155
        %vm160 = vcmask 105472
        %v162 = vsel %vm160, %v151, 0
        %vm164 = vcmask 1045504
        %vm165 = vcmask 1046528
        %v166 = vsel %vm164, 4294967295, 65535
        %v167 = vsel %vm165, %v166, 0
        %v169 = vand.u32 %v158, %v167
        %v172 = vand.u32 %v159, %v167
        %174 = vmatpush.bf16.msra.mxu0 0
        %175 = vmatpush.bf16.msra.mxu0 0
        %176 = vmatpush.bf16.msra.mxu0 0
        %177 = vmatpush.bf16.msra.mxu0 0
        %178 = vmatpush.bf16.msra.mxu0 0
        %179 = vmatpush.bf16.msra.mxu0 0
        %180 = vmatpush.bf16.msra.mxu0 0
        %181 = vmatpush.bf16.msra.mxu0 %v169
        %182 = vmatmul.bf16.gmra.mxu0 %v162
        %v183 = vpop.f32.mrf.mxu0
        %v184 = vadd.f32 0.0, %v183
        %v185 = vpop.f32.mrf.mxu0
        %v186 = vadd.f32 0.0, %v185
        %187 = vdwg.mxu0
        %188 = vmatpush.bf16.msra.mxu0 0
        %189 = vmatpush.bf16.msra.mxu0 0
        %190 = vmatpush.bf16.msra.mxu0 0
        %191 = vmatpush.bf16.msra.mxu0 0
        %192 = vmatpush.bf16.msra.mxu0 0
        %193 = vmatpush.bf16.msra.mxu0 0
        %194 = vmatpush.bf16.msra.mxu0 0
        %195 = vmatpush.bf16.msra.mxu0 %v172
        %196 = vmatmul.bf16.gmra.mxu0 %v162
        %v197 = vpop.f32.mrf.mxu0
        %v198 = vadd.f32 0.0, %v197
        %v199 = vpop.f32.mrf.mxu0
        %v200 = vadd.f32 0.0, %v199
        %201 = vdwg.mxu0
        %v202 = vxor.u32 %v186, 2147483648
        %v203 = vxor.u32 %v200, 2147483648
        %v204 = vmul.f32 %v202, 1.442695
        %v205 = vpow.pop %v204
        %v206 = vmul.f32 %v203, 1.442695
        %v207 = vpow.pop %v206
        %v208 = vadd.f32 %v205, 1.0
        %v209 = vadd.f32 %v207, 1.0
        %v210 = vrcp.pop %v208
        %v211 = vmul.f32 %v208, %v210
        %v212 = vsub.f32 1.0, %v211
        %v213 = vmul.f32 %v210, %v212
        %v214 = vadd.f32 %v210, %v213
        %vm215 = vweird.f32 %v208
        %vm216 = vweird.f32 %v210
        %vm217 = vmor %vm215, %vm216
        %v218 = vsel %vm217, %v210, %v214
        %v219 = vand.u32 2147483647, %v208
        %vm220 = vcmp.eq.f32.partialorder %v219, 8.507059e+37
        %v221 = vand.u32 %v208, 2147483648
        %v222 = vor.u32 1.1754944e-38, %v221
        %v223 = vsel %vm220, %v222, %v218
        %v224 = vmul.f32 1.0, %v223
        %v225 = vrcp.pop %v209
        %v226 = vmul.f32 %v209, %v225
        %v227 = vsub.f32 1.0, %v226
        %v228 = vmul.f32 %v225, %v227
        %v229 = vadd.f32 %v225, %v228
        %vm230 = vweird.f32 %v209
        %vm231 = vweird.f32 %v225
        %vm232 = vmor %vm230, %vm231
        %v233 = vsel %vm232, %v225, %v229
        %v234 = vand.u32 2147483647, %v209
        %vm235 = vcmp.eq.f32.partialorder %v234, 8.507059e+37
        %v236 = vand.u32 %v209, 2147483648
        %v237 = vor.u32 1.1754944e-38, %v236
        %v238 = vsel %vm235, %v237, %v233
        %v239 = vmul.f32 1.0, %v238
        %v240 = vmul.f32 %v184, %v224
        %v241 = vmul.f32 %v198, %v239
        %242 = vst [vmem:[%s136] sm:$0xff] %v240
        %vm243 = vcmask 261120
        %244 = vst.msk [vmem:[%s136 + $0x8] sm:$0xff] %vm243, %v241
        %s245 = sand.u32 %s71, 1
        %s246 = scalar_lea.sflag [#allocation3], %s245
        %s247 = sand.u32 %s71, 1
        %s248 = smul.addr %s247, 16
        %s249 = scalar_lea.vmem [#allocation2], %s248
        // Predicated region
        $region29: #{tpu_custom_call.1} parent=27 // pred_check
          %p250 = pneg %p81
        $region30: #{tpu_custom_call.1} parent=27 // pred_check_branch
          %252 = sbr.rel (%p250) target = $region32
        $region31: #{tpu_custom_call.1} parent=27 // pred_region
          %254 = vsyncadd %s246, 0
          %s255 = smul.addr %s16, 2
          %s256 = smul.addr %s255, 8
          %s257 = scalar_lea.hbm %s2, %s256
          %s259 = sshll.u32 %s249, 4
          %s260 = int_to_ptr.vmem [resolvable:$true] %s259
          %s261 = sshll.u32 %s257, 4
          %s262 = int_to_ptr.hbm [resolvable:$true] %s261
          %264 = dma.vmem_to_hbm [thread:$0]  %s260, 256, %s262, %s246
        $region32: #{tpu_custom_call.1} parent=27 // pred_fallthru
          _
      $region28: #{tpu_custom_call.1} parent=5 // pred_fallthru
        _
      %p265 = scmp.le.s32.totalorder 2, %s11
      // Predicated region
      $region33: #{tpu_custom_call.1} parent=5 // pred_check
        %p266 = pneg %p265
      $region34: #{tpu_custom_call.1} parent=5 // pred_check_branch
        %268 = sbr.rel (%p266) target = $region36
      $region35: #{tpu_custom_call.1} parent=5 // pred_region
        %s269 = ssub.s32 %s11, 2
        // Predicated region
        $region37: #{tpu_custom_call.1} parent=35 // pred_check
          %p270 = pneg %p87
        $region38: #{tpu_custom_call.1} parent=35 // pred_check_branch
          %272 = sbr.rel (%p270) target = $region40
        $region39: #{tpu_custom_call.1} parent=35 // pred_region
          %s273 = sand.u32 %s72, 1
          %s274 = scalar_lea.sflag [#allocation3], %s273
          %s275 = sand.u32 %s72, 1
          %s276 = smul.addr %s275, 16
          %s277 = scalar_lea.vmem [#allocation2], %s276
          %279 = dma.done %s274, 256
        $region40: #{tpu_custom_call.1} parent=35 // pred_fallthru
          _
      $region36: #{tpu_custom_call.1} parent=5 // pred_fallthru
        _
    $region6: #{tpu_custom_call.1} parent=1 // loop_footer
      %s15 = sadd.s32 1, %s11
    $region7: #{tpu_custom_call.1} parent=1 // loop_footer_branch
      %10 = sbr.rel target = $region3
    $region8: #{tpu_custom_call.1} parent=1 // loop_exit
      _
    %280 = vsyncpa [#allocation3], 1
    %s281 = scalar_lea.sflag [#allocation3], 1
    %282 = vsyncpa %s281, 1

</llo_original>
